<compile_context>
chip_gen: v7x
topology: tpu7x:2x2x1
jax: 0.10.0
libtpu: 0.0.40
codegen_flags: <defaults>
</compile_context>

<pallas_src>
import numpy as np
import jax
import jax.numpy as jnp
from jax.experimental import pallas as pl
from jax.experimental.pallas import tpu as pltpu


TARGET_DISTANCES = [5, 10, 15, 20, 25, 30, 35, 40, 50, 60, 70, 80,
                    95, 110, 125, 145, 165]

_PRED_ROWS = 17
_PRED_COLS = 3
_FLAT = _PRED_ROWS * _PRED_COLS      # 51
_LANES = 128                          # TPU lane width
# Minimum lane-dense block height that is both a multiple of 8 (sublane rule)
# and a multiple of 51 (so every block holds the identical repeated pattern):
# lcm(8, 51) = 408 rows -> 408*128 elements = 1024 batch rows per grid step.
_BLOCK_ROWS = 408
_TB_BATCH = _BLOCK_ROWS * _LANES // _FLAT   # 1024 batch rows per grid step
# Below this batch size (output < ~64 KiB) a fused XLA broadcast is strictly
# faster than a custom-call launch.
_SMALL_BATCH_FASTPATH = 320


def _round_up(n, m):
    return ((n + m - 1) // m) * m


def init_hp_baseline(target_distances=TARGET_DISTANCES):
    """Parameter init identical to the PyTorch __init__, plus a derived
    lane-dense pattern tile (recompute the tile whenever the parameter
    changes — it is a cheap, once-per-update preprocessing step)."""
    arr = np.zeros((_PRED_ROWS, _PRED_COLS), dtype=np.float32)
    arr[:, 0] = np.asarray(target_distances, dtype=np.float32)
    flat = arr.reshape(-1)                                        # (51,)
    # tile[r, c] = flat[(r*128 + c) % 51]: the flat (B, 51) output in
    # row-major order, one 1024-batch-row chunk, laid out 128 lanes wide.
    tile = np.tile(flat, _TB_BATCH).reshape(_BLOCK_ROWS, _LANES)  # (408, 128)
    return {
        "static_prediction": jnp.asarray(arr),         # learned (17, 3) param
        "flat_static_prediction": jnp.asarray(flat),   # (51,) flattened view
        "lane_dense_tile": jnp.asarray(tile),          # (408, 128) derived buf
    }


def _hp_baseline_kernel(tile_ref, out_ref):
    # tile_ref: (block_rows, 128) lane-dense pattern, resident in VMEM
    #           (constant block index -> fetched from HBM exactly once).
    # out_ref:  (block_rows, 128) output block.
    # Pure full-width copy: unmasked vst, aligned writeback rows.
    out_ref[...] = tile_ref[...]


def _hp_pallas_broadcast(lane_dense_tile, batch_padded):
    """Writes the flattened (batch_padded, 51) broadcast in lane-dense form.
    batch_padded must be a multiple of 128."""
    rows = batch_padded * _FLAT // _LANES
    if rows >= _BLOCK_ROWS:
        block_rows = _BLOCK_ROWS
        tile_in = lane_dense_tile
    else:
        # Single block; block shape == full array shape (allowed even though
        # `rows` is not a multiple of 8).
        block_rows = rows
        tile_in = lane_dense_tile[:rows]
    grid = (pl.cdiv(rows, block_rows),)

    out = pl.pallas_call(
        _hp_baseline_kernel,
        out_shape=jax.ShapeDtypeStruct((rows, _LANES), jnp.float32),
        grid=grid,
        # Pattern: constant block index -> DMA'd once, no re-fetch per step.
        in_specs=[pl.BlockSpec((block_rows, _LANES), lambda i: (0, 0))],
        # Output: lane-dense (·, 128) tiles; trailing partial block is masked.
        out_specs=pl.BlockSpec((block_rows, _LANES), lambda i: (i, 0)),
        compiler_params=pltpu.CompilerParams(
            dimension_semantics=("parallel",)),
        cost_estimate=pl.CostEstimate(
            flops=0,
            transcendentals=0,
            bytes_accessed=(rows + block_rows) * _LANES * 4),
    )(tile_in)
    # Row-major reshape back to the logical (batch, 51) layout (free/bitcast).
    return out.reshape(batch_padded, _FLAT)


def hp_baseline_forward(x, params, *, force_pallas=False):
    """Equivalent of HPBaseline.forward(x).

    x:      any array whose leading dim is the batch size (contents unused).
    params: dict from init_hp_baseline().
    returns (batch, 51) float32.
    """
    batch = x.shape[0]

    if not force_pallas and batch < _SMALL_BATCH_FASTPATH:
        # Custom-call launch overhead dwarfs a few-KiB write; let XLA fuse it.
        return jnp.broadcast_to(params["flat_static_prediction"][None, :],
                                (batch, _FLAT))

    # Lane-dense layout needs batch*51 to be a multiple of 128 (gcd(51,128)=1).
    batch_padded = _round_up(batch, _LANES)
    y = _hp_pallas_broadcast(params["lane_dense_tile"], batch_padded)
    if batch_padded != batch:
        y = y[:batch]
    return y


if __name__ == "__main__":
    key = jax.random.PRNGKey(0)
    # Small NCHW example input consistent with an image-model baseline.
    # The module only ever reads x.shape[0].
    x = jax.random.normal(key, (2, 4, 16, 16), dtype=jnp.float32)

    params = init_hp_baseline()

    def ref_fn(b):
        return jnp.broadcast_to(params["static_prediction"][None, :, :],
                                (b, _PRED_ROWS, _PRED_COLS)).reshape(b, _FLAT)

    # 1) Pallas path at the spec's batch=2 (forced past the small-batch bypass).
    y = jax.block_until_ready(hp_baseline_forward(x, params, force_pallas=True))
    assert y.shape == (2, _FLAT), y.shape
    assert y.dtype == jnp.float32
    np.testing.assert_array_equal(np.asarray(y), np.asarray(ref_fn(2)))

    # 2) Default small-batch fast path at batch=2.
    y_fast = jax.block_until_ready(hp_baseline_forward(x, params))
    np.testing.assert_array_equal(np.asarray(y_fast), np.asarray(ref_fn(2)))

    # 3) Larger batch: multi-step grid (3 steps), masked partial last block,
    #    and a non-multiple-of-128 batch handled by pad + slice.
    x_big = jnp.zeros((2053, 3), dtype=jnp.float32)   # contents unused
    y_big = jax.block_until_ready(hp_baseline_forward(x_big, params))
    assert y_big.shape == (2053, _FLAT), y_big.shape
    np.testing.assert_array_equal(np.asarray(y_big), np.asarray(ref_fn(2053)))

    print("KERNEL_OK")
</pallas_src>

<mosaic_0001>
module attributes {stable_mosaic.version = 11 : i64} {
  func.func @_hp_baseline_kernel(%arg0: i32, %arg1: memref<51x128xf32, #tpu.memory_space<vmem>>, %arg2: memref<51x128xf32, #tpu.memory_space<vmem>>) attributes {dimension_semantics = [#tpu.dimension_semantics<parallel>], iteration_bounds = array<i64: 1>, scalar_prefetch = 0 : i64, scratch_operands = 0 : i64, tpu.core_type = #tpu.core_type<tc>, window_params = [{pipeline_mode = #tpu.pipeline_mode<synchronous>, transform_indices = @transform_0, window_bounds = array<i64: 51, 128>}, {transform_indices = @transform_1, window_bounds = array<i64: 51, 128>}]} {
    %c0 = arith.constant 0 : index
    %c0_0 = arith.constant 0 : index
    %0 = vector.load %arg1[%c0, %c0_0] : memref<51x128xf32, #tpu.memory_space<vmem>>, vector<51x128xf32>
    %c0_1 = arith.constant 0 : index
    %c0_2 = arith.constant 0 : index
    %1 = vector.load %arg2[%c0_1, %c0_2] : memref<51x128xf32, #tpu.memory_space<vmem>>, vector<51x128xf32>
    tpu.vector_store %arg2[%c0_1, %c0_2], %0 {strides = array<i32>} : memref<51x128xf32, #tpu.memory_space<vmem>>, vector<51x128xf32>,
    return
  }
  func.func @transform_0(%arg0: i32) -> (i32, i32) {
    %c0_i32 = arith.constant 0 : i32
    %c0_i32_0 = arith.constant 0 : i32
    %c0_i32_1 = arith.constant 0 : i32
    return %c0_i32, %c0_i32_0 : i32, i32
  }
  func.func @transform_1(%arg0: i32) -> (i32, i32) {
    %c0_i32 = arith.constant 0 : i32
    %c0_i32_0 = arith.constant 0 : i32
    return %arg0, %c0_i32 : i32, i32
  }
}

</mosaic_0001>

<llo_original>
// kernel: tpu_custom_call.1
$region0: #{tpu_custom_call.1}
  #allocation0 [shape = 'u32[]', space=smem, size = 0x4, offset = 0x4, fixed_abs, tag = 'smem constant byte address 0x4 - core index']
  #allocation1 [shape = 'u32[144,128]{1,0:T(1,128)}', space=vmem, size = 0x12000, scoped, tag = 'internal scratch']
  %s0 = inlined_call_operand.hbm [shape: f32[51,128], index: 0, kind: input, shape index: {}]
  %s1 = inlined_call_operand.hbm [shape: f32[51,128], index: 1, kind: output, shape index: {}]
  %s2 = sld [smem:[#allocation0]]
  $region18: #{tpu_custom_call.1} parent=0
    _
  %s4 = ssub.s32 1, %s2
  %s5 = scalar_select 0, %s4, %s2
  $region1: #{tpu_custom_call.1} parent=0
    #allocation2 [shape = 'u8[28672]{0}', space=vmem, size = 0x7000, scoped, tag = 'input window, operand 0, single buffered']
    #allocation3 [shape = 's32[1]{0}', space=sflag, size = 0x4, scoped, tag = 'scoped memory for tpu_custom_call.1']
    #allocation4 [shape = 's32[1]{0}', space=sflag, size = 0x4, scoped, tag = 'scoped memory for tpu_custom_call.1']
    #allocation5 [shape = 'u8[28672]{0}', space=vmem, size = 0x7000, scoped, tag = 'output window, operand 0, single buffered']
    %6 = vsyncpa [#allocation3], 0
    %7 = vsyncpa [#allocation4], 0
    // Predicated region
    $region2: #{tpu_custom_call.1} parent=1 // pred_check
      _
    $region3: #{tpu_custom_call.1} parent=1 // pred_check_branch
      %9 = sbr.rel (0) target = $region5
    $region4: #{tpu_custom_call.1} parent=1 // pred_region
      %s11 = ssub.s32 896, 896
      %12 = vsyncadd [#allocation3], %s11
      %s13 = sshll.u32 [#allocation2], 4
      %s14 = int_to_ptr.vmem [resolvable:$true] %s13
      %19 = dma.hbm_to_vmem [thread:$0]  %s0, 896, %s14, [#allocation3], 128, 128, 8
    $region5: #{tpu_custom_call.1} parent=1 // pred_fallthru
      _
    // Predicated region
    $region6: #{tpu_custom_call.1} parent=1 // pred_check
      _
    $region7: #{tpu_custom_call.1} parent=1 // pred_check_branch
      %21 = sbr.rel (0) target = $region9
    $region8: #{tpu_custom_call.1} parent=1 // pred_region
      %22 = dma.done [#allocation3], 896
    $region9: #{tpu_custom_call.1} parent=1 // pred_fallthru
      _
    %v23 = vld [vmem:[#allocation2] sm:$0xff]
    %v24 = vld [vmem:[#allocation2 + $0x8] sm:$0xff]
    %v25 = vld [vmem:[#allocation2 + $0x10] sm:$0xff]
    %v26 = vld [vmem:[#allocation2 + $0x18] sm:$0xff]
    %v27 = vld [vmem:[#allocation2 + $0x20] sm:$0xff]
    %v28 = vld [vmem:[#allocation2 + $0x28] sm:$0xff]
    %v29 = vld [vmem:[#allocation2 + $0x30] sm:$0x7]
    %30 = vst [vmem:[#allocation5] sm:$0xff] %v23
    %31 = vst [vmem:[#allocation5 + $0x8] sm:$0xff] %v24
    %32 = vst [vmem:[#allocation5 + $0x10] sm:$0xff] %v25
    %33 = vst [vmem:[#allocation5 + $0x18] sm:$0xff] %v26
    %34 = vst [vmem:[#allocation5 + $0x20] sm:$0xff] %v27
    %35 = vst [vmem:[#allocation5 + $0x28] sm:$0xff] %v28
    %36 = vst [vmem:[#allocation5 + $0x30] sm:$0x7] %v29
    // Predicated region
    $region10: #{tpu_custom_call.1} parent=1 // pred_check
      _
    $region11: #{tpu_custom_call.1} parent=1 // pred_check_branch
      %38 = sbr.rel (0) target = $region13
    $region12: #{tpu_custom_call.1} parent=1 // pred_region
      %s40 = ssub.s32 896, 896
      %41 = vsyncadd [#allocation4], %s40
      %s42 = sshll.u32 [#allocation5], 4
      %s43 = int_to_ptr.vmem [resolvable:$true] %s42
      %48 = dma.vmem_to_hbm [thread:$0]  %s43, 896, %s1, [#allocation4], 128, 128, 8
    $region13: #{tpu_custom_call.1} parent=1 // pred_fallthru
      _
    // Predicated region
    $region14: #{tpu_custom_call.1} parent=1 // pred_check
      _
    $region15: #{tpu_custom_call.1} parent=1 // pred_check_branch
      %50 = sbr.rel (0) target = $region17
    $region16: #{tpu_custom_call.1} parent=1 // pred_region
      %51 = dma.done [#allocation4], 896
    $region17: #{tpu_custom_call.1} parent=1 // pred_fallthru
      _
    %52 = vsyncpa [#allocation3], 1
    %53 = vsyncpa [#allocation4], 1

</llo_original>
